<compile_context>
chip_gen: v6e
topology: v6e:2x2x1
jax: 0.10.0
libtpu: 0.0.40
codegen_flags: <defaults>
</compile_context>

<pallas_src>
import functools

import jax
import jax.numpy as jnp
from jax.experimental import pallas as pl
from jax.experimental.pallas import tpu as pltpu


def _round_up(x, m):
    return (x + m - 1) // m * m


def _cdiv(a, b):
    return -(-a // b)


def _tile_budget_and_vmem_limit():
    """Per-generation (input-tile byte budget, vmem_limit_bytes)."""
    try:
        cap = int(pltpu.get_tpu_info().vmem_capacity_bytes)
    except Exception:
        cap = 64 << 20  # conservative fallback: assume v7x-sized VMEM
    if cap >= (100 << 20):
        # v5e / v6e: 128 MiB physical VMEM; the 16/32 MiB scoped *default* is
        # what limits tile size, so raise it explicitly.
        return 16 << 20, 64 << 20
    # v7x: only 64 MiB physical VMEM per TensorCore — keep the double-buffered
    # working set (2 x 8 MiB + tiny output) well under the 32 MiB scoped limit.
    return 8 << 20, 32 << 20


def _choose_tiles(R, HW, itemsize, budget_bytes):
    """Pick (r_tile multiple of 8, hw_tile multiple of 128) from a byte budget.

    hw_tile is grown preferentially (rows of the flattened input are contiguous
    H*W runs, so longer lane tiles mean longer contiguous HBM bursts); the
    reduction axis is collapsed whenever it fits.  Rows are split into >= 2
    blocks when possible so the v7x second TensorCore gets parallel work.
    """
    hw_full = _round_up(HW, 128)
    r_pad = _round_up(R, 8)
    r_blocks_min = 2 if r_pad >= 16 else 1  # feed both TCs on v7x when we can

    rows_at_full_hw = budget_bytes // (hw_full * itemsize)
    if rows_at_full_hw >= 8:
        # Collapse the reduction grid axis entirely.
        hw_tile = hw_full
        r_target = _round_up(_cdiv(r_pad, r_blocks_min), 8)
        r_tile = max(8, min(r_pad, r_target, (rows_at_full_hw // 8) * 8))
    else:
        # Huge images: minimal row tile, lane tile from the byte budget.
        r_tile = 8
        hw_tile = (budget_bytes // (8 * itemsize) // 128) * 128
        hw_tile = max(128, min(hw_tile, hw_full))
    return r_tile, hw_tile


def _pool_sum_kernel(x_ref, sums_ref, *, hw_valid, hw_tile, need_mask):
    # x_ref   : (r_tile, hw_tile) tile of the flattened (N*C, H*W) input,
    #           streamed in its native dtype (bf16 stays bf16 in HBM/VMEM).
    # sums_ref: (r_tile, 1) f32 output block, resident across the hw grid axis
    #           -> acts directly as the f32 accumulator.
    h = pl.program_id(1)

    @pl.when(h == 0)
    def _():
        sums_ref[...] = jnp.zeros_like(sums_ref)

    xf = x_ref[...].astype(jnp.float32)
    if need_mask:
        # Ragged last H*W block: Pallas fills out-of-bounds reads with
        # unspecified data, so zero the invalid lanes before accumulating.
        col = h * hw_tile + jax.lax.broadcasted_iota(jnp.int32, xf.shape, 1)
        xf = jnp.where(col < hw_valid, xf, 0.0)
    sums_ref[...] += jnp.sum(xf, axis=-1, keepdims=True)


def simplified_channel_attention(x, weight, bias, lens_factor=None,
                                 apply_lens_factor=False,
                                 tile_budget_bytes=None):
    """x: (N, C, H, W); weight: (C, C, 1, 1) conv weight; bias: (C,).

    Returns (N, C, 1, 1), matching SimplifiedChannelAttention.forward.
    """
    N, C, H, W = x.shape
    HW = H * W
    R = N * C

    # Dense 2-D layout: rows = (n, c) pairs (sublanes), lanes = spatial.
    # This reshape of contiguous data is free; no wrapper padding is done.
    x2 = x.reshape(R, HW)
    itemsize = jnp.dtype(x.dtype).itemsize

    budget, vmem_limit = _tile_budget_and_vmem_limit()
    if tile_budget_bytes is not None:  # test / tuning override
        budget = tile_budget_bytes

    r_tile, hw_tile = _choose_tiles(R, HW, itemsize, budget)
    r_blocks = _cdiv(R, r_tile)
    hw_blocks = _cdiv(HW, hw_tile)
    need_mask = (HW % hw_tile) != 0

    kernel = functools.partial(_pool_sum_kernel, hw_valid=HW,
                               hw_tile=hw_tile, need_mask=need_mask)

    sums = pl.pallas_call(
        kernel,
        out_shape=jax.ShapeDtypeStruct((r_blocks * r_tile, 1), jnp.float32),
        grid=(r_blocks, hw_blocks),
        in_specs=[pl.BlockSpec((r_tile, hw_tile), lambda r, h: (r, h))],
        out_specs=pl.BlockSpec((r_tile, 1), lambda r, h: (r, 0)),
        compiler_params=pltpu.CompilerParams(
            dimension_semantics=("parallel", "arbitrary"),
            vmem_limit_bytes=vmem_limit),
        cost_estimate=pl.CostEstimate(
            flops=R * HW,
            transcendentals=0,
            bytes_accessed=R * HW * itemsize + r_blocks * r_tile * 4),
    )(x2)

    # Tiny O(N*C*C) finalize left to XLA: mean, 1x1 conv as (N,C)@(C,C)^T, bias.
    pooled = sums[:R, 0].reshape(N, C) * jnp.float32(1.0 / HW)      # (N, C)
    w = weight.reshape(C, C).astype(jnp.float32)                    # (Cout,Cin)
    out = pooled @ w.T + bias.astype(jnp.float32)[None, :]          # (N, C)
    out = out.reshape(N, C, 1, 1).astype(x.dtype)

    if apply_lens_factor:
        # ApplyVectorWeights: plain broadcast multiply, like PyTorch x*weights.
        out = out * jnp.asarray(lens_factor, out.dtype)
    return out


def _reference(x, weight, bias, lens_factor=None, apply_lens_factor=False):
    pooled = jnp.mean(x.astype(jnp.float32), axis=(2, 3))           # (N, C)
    w = weight.reshape(weight.shape[0], weight.shape[1]).astype(jnp.float32)
    out = pooled @ w.T + bias.astype(jnp.float32)[None, :]
    out = out.reshape(x.shape[0], x.shape[1], 1, 1).astype(x.dtype)
    if apply_lens_factor:
        out = out * jnp.asarray(lens_factor, out.dtype)
    return out


if __name__ == "__main__":
    key = jax.random.PRNGKey(0)
    kx, kw, kb, kl, kx2, kx3 = jax.random.split(key, 6)

    # Case 1: module defaults (apply_lens_factor=False), f32, aligned shapes.
    N, C, H, W = 2, 4, 16, 16
    x = jax.random.normal(kx, (N, C, H, W), dtype=jnp.float32)
    weight = jax.random.normal(kw, (C, C, 1, 1), dtype=jnp.float32) * 0.1
    bias = jax.random.normal(kb, (C,), dtype=jnp.float32) * 0.1

    y = jax.block_until_ready(simplified_channel_attention(x, weight, bias))
    y_ref = _reference(x, weight, bias)
    assert y.shape == (N, C, 1, 1)
    assert jnp.allclose(y, y_ref, atol=1e-5, rtol=1e-5)

    # Case 2: bf16 input streamed natively (f32 accumulation inside kernel).
    x_bf16 = x.astype(jnp.bfloat16)
    y_b = jax.block_until_ready(
        simplified_channel_attention(x_bf16, weight, bias))
    y_b_ref = _reference(x_bf16, weight, bias)
    assert y_b.dtype == jnp.bfloat16
    assert jnp.allclose(y_b.astype(jnp.float32), y_b_ref.astype(jnp.float32),
                        atol=1e-2, rtol=1e-2)

    # Case 3: lens-factor path + unaligned H*W and rows (in-kernel masking,
    # ragged row block sliced afterwards).
    N2, C2, H2, W2 = 1, 3, 10, 10
    x_small = jax.random.normal(kx2, (N2, C2, H2, W2), dtype=jnp.float32)
    w_small = jax.random.normal(kw, (C2, C2, 1, 1), dtype=jnp.float32) * 0.1
    b_small = jax.random.normal(kb, (C2,), dtype=jnp.float32) * 0.1
    lf = jax.random.normal(kl, (N2, C2, 1, 1), dtype=jnp.float32)

    y2 = jax.block_until_ready(
        simplified_channel_attention(x_small, w_small, b_small,
                                     lens_factor=lf, apply_lens_factor=True))
    y2_ref = _reference(x_small, w_small, b_small,
                        lens_factor=lf, apply_lens_factor=True)
    assert jnp.allclose(y2, y2_ref, atol=1e-5, rtol=1e-5)

    # Case 4: multiple row blocks (R=24 -> >=2 parallel blocks) + ragged H*W.
    N3, C3, H3, W3 = 2, 12, 13, 13
    x3 = jax.random.normal(kx3, (N3, C3, H3, W3), dtype=jnp.float32)
    w3 = jax.random.normal(kw, (C3, C3, 1, 1), dtype=jnp.float32) * 0.1
    b3 = jax.random.normal(kb, (C3,), dtype=jnp.float32) * 0.1
    y3 = jax.block_until_ready(simplified_channel_attention(x3, w3, b3))
    y3_ref = _reference(x3, w3, b3)
    assert jnp.allclose(y3, y3_ref, atol=1e-5, rtol=1e-5)

    # Case 5: tiny forced tile budget to exercise the multi-step reduction
    # grid axis + masked ragged last H*W block.
    N4, C4, H4, W4 = 2, 4, 30, 30
    x4 = jax.random.normal(kx, (N4, C4, H4, W4), dtype=jnp.float32)
    w4 = jax.random.normal(kw, (C4, C4, 1, 1), dtype=jnp.float32) * 0.1
    b4 = jax.random.normal(kb, (C4,), dtype=jnp.float32) * 0.1
    y4 = jax.block_until_ready(
        simplified_channel_attention(x4, w4, b4, tile_budget_bytes=16 * 1024))
    y4_ref = _reference(x4, w4, b4)
    assert jnp.allclose(y4, y4_ref, atol=1e-5, rtol=1e-5)

    print("KERNEL_OK")
</pallas_src>

<mosaic_0001>
module attributes {stable_mosaic.version = 11 : i64} {
  func.func @_pool_sum_kernel(%arg0: i32, %arg1: i32, %arg2: memref<8x256xf32, #tpu.memory_space<vmem>>, %arg3: memref<8x1xf32, #tpu.memory_space<vmem>>) attributes {dimension_semantics = [#tpu.dimension_semantics<parallel>, #tpu.dimension_semantics<arbitrary>], iteration_bounds = array<i64: 1, 1>, scalar_prefetch = 0 : i64, scratch_operands = 0 : i64, tpu.core_type = #tpu.core_type<tc>, window_params = [{transform_indices = @transform_0, window_bounds = array<i64: 8, 256>}, {transform_indices = @transform_1, window_bounds = array<i64: 8, 1>}]} {
    %c0_i32 = arith.constant 0 : i32
    %0 = arith.cmpi eq, %arg1, %c0_i32 : i32
    %1 = arith.extui %0 : i1 to i32
    %c0_i32_0 = arith.constant 0 : i32
    %2 = arith.cmpi ne, %1, %c0_i32_0 : i32
    scf.if %2 {
      %cst_6 = arith.constant 0.000000e+00 : f32
      %9 = vector.broadcast %cst_6 : f32 to vector<8x1xf32>
      %c0_7 = arith.constant 0 : index
      %c0_8 = arith.constant 0 : index
      %10 = vector.load %arg3[%c0_7, %c0_8] : memref<8x1xf32, #tpu.memory_space<vmem>>, vector<8x1xf32>
      tpu.vector_store %arg3[%c0_7, %c0_8], %9 {strides = array<i32>} : memref<8x1xf32, #tpu.memory_space<vmem>>, vector<8x1xf32>,
    } else {
    }
    %c0 = arith.constant 0 : index
    %c0_1 = arith.constant 0 : index
    %3 = vector.load %arg2[%c0, %c0_1] : memref<8x256xf32, #tpu.memory_space<vmem>>, vector<8x256xf32>
    %c0_2 = arith.constant 0 : index
    %c0_3 = arith.constant 0 : index
    %4 = vector.load %arg3[%c0_2, %c0_3] : memref<8x1xf32, #tpu.memory_space<vmem>>, vector<8x1xf32>
    %cst = arith.constant dense<0.000000e+00> : vector<8xf32>
    %5 = vector.multi_reduction <add>, %3, %cst [1] : vector<8x256xf32> to vector<8xf32>
    %6 = vector.shape_cast %5 : vector<8xf32> to vector<8x1xf32>
    %7 = arith.addf %4, %6 : vector<8x1xf32>
    %c0_4 = arith.constant 0 : index
    %c0_5 = arith.constant 0 : index
    %8 = vector.load %arg3[%c0_4, %c0_5] : memref<8x1xf32, #tpu.memory_space<vmem>>, vector<8x1xf32>
    tpu.vector_store %arg3[%c0_4, %c0_5], %7 {strides = array<i32>} : memref<8x1xf32, #tpu.memory_space<vmem>>, vector<8x1xf32>,
    return
  }
  func.func @transform_0(%arg0: i32, %arg1: i32) -> (i32, i32) {
    %c0_i32 = arith.constant 0 : i32
    return %arg0, %arg1 : i32, i32
  }
  func.func @transform_1(%arg0: i32, %arg1: i32) -> (i32, i32) {
    %c0_i32 = arith.constant 0 : i32
    %c0_i32_0 = arith.constant 0 : i32
    return %arg0, %c0_i32 : i32, i32
  }
}

</mosaic_0001>

<llo_original>
// kernel: tpu_custom_call.1
$region0: #{tpu_custom_call.1}
  #allocation0 [shape = 'u32[]', space=smem, size = 0x4, offset = 0x4, fixed_abs, tag = 'smem constant byte address 0x4 - core index']
  #allocation1 [shape = 'u32[144,128]{1,0:T(1,128)}', space=vmem, size = 0x12000, scoped, tag = 'internal scratch']
  %s0 = inlined_call_operand.hbm [shape: f32[8,256], index: 0, kind: input, shape index: {}]
  %s1 = inlined_call_operand.vmem [shape: f32[8,1], index: 1, kind: output, shape index: {}]
  %s2 = sld [smem:[#allocation0]]
  $region22: #{tpu_custom_call.1} parent=0
    _
  %s4 = ssub.s32 1, %s2
  %s5 = scalar_select 0, %s4, %s2
  $region1: #{tpu_custom_call.1} parent=0
    #allocation2 [shape = 'u8[8192]{0}', space=vmem, size = 0x2000, scoped, tag = 'input window, operand 0, single buffered']
    #allocation3 [shape = 's32[1]{0}', space=sflag, size = 0x4, scoped, tag = 'scoped memory for tpu_custom_call.1']
    %6 = vsyncpa [#allocation3], 0
    // Predicated region
    $region2: #{tpu_custom_call.1} parent=1 // pred_check
      _
    $region3: #{tpu_custom_call.1} parent=1 // pred_check_branch
      %8 = sbr.rel (0) target = $region5
    $region4: #{tpu_custom_call.1} parent=1 // pred_region
      %s10 = ssub.s32 256, 256
      %11 = vsyncadd [#allocation3], %s10
      %s13 = sshll.u32 [#allocation2], 4
      %s14 = int_to_ptr.vmem [resolvable:$true] %s13
      %16 = dma.hbm_to_vmem [thread:$0]  %s0, 256, %s14, [#allocation3]
    $region5: #{tpu_custom_call.1} parent=1 // pred_fallthru
      _
    // Predicated region
    $region6: #{tpu_custom_call.1} parent=1 // pred_check
      _
    $region7: #{tpu_custom_call.1} parent=1 // pred_check_branch
      %18 = sbr.rel (0) target = $region9
    $region8: #{tpu_custom_call.1} parent=1 // pred_region
      %19 = dma.done [#allocation3], 256
    $region9: #{tpu_custom_call.1} parent=1 // pred_fallthru
      _
    %p20 = scmp.eq.s32.totalorder 0, 0
    // Predicated region
    $region10: #{tpu_custom_call.1} parent=1 // pred_check
      %p21 = pneg %p20
    $region11: #{tpu_custom_call.1} parent=1 // pred_check_branch
      %23 = sbr.rel (%p21) target = $region13
    $region12: #{tpu_custom_call.1} parent=1 // pred_region
      %vm24 = vcmask 7168
      %25 = vst.msk [vmem:[%s1] sm:$0xff] %vm24, 0.0
    $region13: #{tpu_custom_call.1} parent=1 // pred_fallthru
      _
    %v26 = vld [vmem:[#allocation2] sm:$0xff]
    %v27 = vld [vmem:[#allocation2 + $0x8] sm:$0xff]
    %v28 = vld [vmem:[%s1] sm:$0xff]
    %v29 = vadd.f32 %v26, %v27
    %30 = vadd.xlane.f32.xlu0 %v29
    %v31 = vpop.xlane.xlu0 %30
    %v32 = vadd.f32 %v28, %v31
    %vm33 = vcmask 7168
    %34 = vst.msk [vmem:[%s1] sm:$0xff] %vm33, %v32
    // Predicated region
    $region14: #{tpu_custom_call.1} parent=1 // pred_check
      _
    $region15: #{tpu_custom_call.1} parent=1 // pred_check_branch
      %36 = sbr.rel (0) target = $region17
    $region16: #{tpu_custom_call.1} parent=1 // pred_region
      _
    $region17: #{tpu_custom_call.1} parent=1 // pred_fallthru
      _
    // Predicated region
    $region18: #{tpu_custom_call.1} parent=1 // pred_check
      _
    $region19: #{tpu_custom_call.1} parent=1 // pred_check_branch
      %38 = sbr.rel (0) target = $region21
    $region20: #{tpu_custom_call.1} parent=1 // pred_region
      _
    $region21: #{tpu_custom_call.1} parent=1 // pred_fallthru
      _
    %39 = vsyncpa [#allocation3], 1

</llo_original>
